<compile_context>
chip_gen: v6e
topology: v6e:2x2x1
jax: 0.10.0
libtpu: 0.0.40
codegen_flags: <defaults>
</compile_context>

<pallas_src>
import functools

import jax
import jax.numpy as jnp
import numpy as np
from jax.experimental import pallas as pl
from jax.experimental.pallas import tpu as pltpu


def _round_up(x: int, m: int) -> int:
    return ((x + m - 1) // m) * m


def _se_kernel(x_ref, w1_ref, b1_ref, w2_ref, b2_ref, o_ref, *, inv_hw):
    # x_ref: (B_tile, C, HW) — native NCHW view; spatial on lanes, channels on sublanes.
    # Squeeze: exact mean over spatial (lane-axis reduce), f32 accumulation.
    mean = jnp.sum(x_ref[...].astype(jnp.float32), axis=2) * inv_hw       # (B_tile, C)

    # Excitation: two tiny FCs with f32 accumulation + ReLU + sigmoid.
    h = jnp.dot(mean, w1_ref[...], preferred_element_type=jnp.float32) + b1_ref[...]
    h = jnp.maximum(h, 0.0)
    z = jnp.dot(h, w2_ref[...], preferred_element_type=jnp.float32) + b2_ref[...]
    scale = jax.nn.sigmoid(z).astype(o_ref.dtype)                         # (B_tile, C)

    # Rescale: re-read x_ref (don't keep a full-tile f32 temp live across the FCs)
    # and write once, broadcasting the per-channel scale along the lane (spatial) axis.
    o_ref[...] = x_ref[...] * scale[:, :, None]


def _pick_batch_tile(n: int, bytes_per_image: int, budget: int = 8 << 20) -> int:
    """Largest batch tile that (a) divides N, (b) keeps double-buffered in+out blocks
    under `budget` bytes of VMEM, and (c) leaves >=2 grid steps when possible so both
    v7x TensorCores get work."""
    max_bt = max(1, budget // max(4 * bytes_per_image, 1))
    divisors = [d for d in range(1, n + 1) if n % d == 0 and d <= max_bt]
    if not divisors:
        return 1
    multi = [d for d in divisors if n // d >= 2]
    return max(multi) if multi else max(divisors)


def se_block(x_nchw, w1, b1, w2, b2):
    """SEBlock forward.

    x_nchw: (N, C, H, W)
    w1: (C//r, C), b1: (C//r,)   -- first Linear (PyTorch out x in layout)
    w2: (C, C//r), b2: (C,)      -- second Linear
    """
    N, C, H, W = x_nchw.shape
    Cr = w1.shape[0]
    HW = H * W

    # (N, C, H, W) -> (N, C, H*W): merging the trailing contiguous dims is free.
    x = x_nchw.reshape(N, C, HW)

    # Pad only the tiny hidden dim of the weights to a lane-friendly 128. Padded
    # hidden units stay exactly zero through bias+ReLU and hit zero rows of W2^T,
    # so the result is bit-exact w.r.t. the unpadded math.
    Cr_pad = _round_up(Cr, 128)
    w1_t = jnp.zeros((C, Cr_pad), jnp.float32).at[:, :Cr].set(w1.T.astype(jnp.float32))
    b1_p = jnp.zeros((1, Cr_pad), jnp.float32).at[0, :Cr].set(b1.astype(jnp.float32))
    w2_t = jnp.zeros((Cr_pad, C), jnp.float32).at[:Cr, :].set(w2.T.astype(jnp.float32))
    b2_p = b2.astype(jnp.float32).reshape(1, C)

    itemsize = x.dtype.itemsize
    B_tile = _pick_batch_tile(N, C * HW * itemsize)
    grid = (N // B_tile,)

    # VMEM: double-buffered input + output blocks plus the (small) resident weights.
    # TODO(synk): SE layers whose single-image tile alone exceeds ~48 MiB (v7x VMEM
    # headroom) need a two-pass spatial tiling (pass 1: pooled sums; pass 2: rescale).
    w_bytes = (w1_t.size + b1_p.size + w2_t.size + b2_p.size) * 4
    needed = 4 * B_tile * C * HW * itemsize + 2 * w_bytes + (2 << 20)
    vmem_limit = int(min(max(needed, 32 << 20), 48 << 20))

    kernel = functools.partial(_se_kernel, inv_hw=np.float32(1.0 / HW))

    out = pl.pallas_call(
        kernel,
        out_shape=jax.ShapeDtypeStruct((N, C, HW), x.dtype),
        grid=grid,
        in_specs=[
            # Trailing block dims (C, HW) equal the full array dims, so no (8,128)
            # padding of the activation is required.
            pl.BlockSpec((B_tile, C, HW), lambda n: (n, 0, 0)),   # activation block
            pl.BlockSpec((C, Cr_pad), lambda n: (0, 0)),          # W1^T (padded hidden)
            pl.BlockSpec((1, Cr_pad), lambda n: (0, 0)),          # b1
            pl.BlockSpec((Cr_pad, C), lambda n: (0, 0)),          # W2^T
            pl.BlockSpec((1, C), lambda n: (0, 0)),               # b2
        ],
        out_specs=pl.BlockSpec((B_tile, C, HW), lambda n: (n, 0, 0)),
        compiler_params=pltpu.CompilerParams(
            dimension_semantics=("parallel",),
            vmem_limit_bytes=vmem_limit,
        ),
    )(x, w1_t, b1_p, w2_t, b2_p)

    return out.reshape(N, C, H, W)


def se_block_ref(x, w1, b1, w2, b2):
    """Pure-JAX reference matching the PyTorch SEBlock forward."""
    m = jnp.mean(x, axis=(2, 3))                    # (N, C)
    h = jnp.maximum(m @ w1.T + b1, 0.0)             # Linear + ReLU
    s = jax.nn.sigmoid(h @ w2.T + b2)               # Linear + Sigmoid
    return x * s[:, :, None, None]


if __name__ == "__main__":
    key = jax.random.PRNGKey(0)
    # Shapes consistent with SEBlock(channel=32, reduction=16): hidden = 32 // 16 = 2.
    N, C, H, W = 2, 32, 16, 16
    reduction = 16
    Cr = C // reduction

    k1, k2, k3, k4, k5 = jax.random.split(key, 5)
    x = jax.random.normal(k1, (N, C, H, W), jnp.float32)
    w1 = 0.1 * jax.random.normal(k2, (Cr, C), jnp.float32)
    b1 = 0.1 * jax.random.normal(k3, (Cr,), jnp.float32)
    w2 = 0.1 * jax.random.normal(k4, (C, Cr), jnp.float32)
    b2 = 0.1 * jax.random.normal(k5, (C,), jnp.float32)

    se_block_jit = jax.jit(se_block)
    out = jax.block_until_ready(se_block_jit(x, w1, b1, w2, b2))
    ref = jax.block_until_ready(se_block_ref(x, w1, b1, w2, b2))

    np.testing.assert_allclose(np.asarray(out), np.asarray(ref), rtol=1e-5, atol=1e-5)
    print("KERNEL_OK")
</pallas_src>

<mosaic_0001>
module attributes {stable_mosaic.version = 11 : i64} {
  func.func @_se_kernel(%arg0: i32, %arg1: memref<1x32x256xf32, #tpu.memory_space<vmem>>, %arg2: memref<32x128xf32, #tpu.memory_space<vmem>>, %arg3: memref<1x128xf32, #tpu.memory_space<vmem>>, %arg4: memref<128x32xf32, #tpu.memory_space<vmem>>, %arg5: memref<1x32xf32, #tpu.memory_space<vmem>>, %arg6: memref<1x32x256xf32, #tpu.memory_space<vmem>>) attributes {dimension_semantics = [#tpu.dimension_semantics<parallel>], iteration_bounds = array<i64: 2>, scalar_prefetch = 0 : i64, scratch_operands = 0 : i64, tpu.core_type = #tpu.core_type<tc>, window_params = [{transform_indices = @transform_0, window_bounds = array<i64: 1, 32, 256>}, {pipeline_mode = #tpu.pipeline_mode<synchronous>, transform_indices = @transform_1, window_bounds = array<i64: 32, 128>}, {pipeline_mode = #tpu.pipeline_mode<synchronous>, transform_indices = @transform_2, window_bounds = array<i64: 1, 128>}, {pipeline_mode = #tpu.pipeline_mode<synchronous>, transform_indices = @transform_3, window_bounds = array<i64: 128, 32>}, {pipeline_mode = #tpu.pipeline_mode<synchronous>, transform_indices = @transform_4, window_bounds = array<i64: 1, 32>}, {transform_indices = @transform_5, window_bounds = array<i64: 1, 32, 256>}]} {
    %c0 = arith.constant 0 : index
    %c0_0 = arith.constant 0 : index
    %c0_1 = arith.constant 0 : index
    %0 = vector.load %arg1[%c0, %c0_0, %c0_1] : memref<1x32x256xf32, #tpu.memory_space<vmem>>, vector<1x32x256xf32>
    %cst = arith.constant dense<0.000000e+00> : vector<1x32xf32>
    %1 = vector.multi_reduction <add>, %0, %cst [2] : vector<1x32x256xf32> to vector<1x32xf32>
    %cst_2 = arith.constant 3.906250e-03 : f32
    %2 = vector.broadcast %cst_2 : f32 to vector<1x32xf32>
    %3 = arith.mulf %1, %2 : vector<1x32xf32>
    %c0_3 = arith.constant 0 : index
    %c0_4 = arith.constant 0 : index
    %4 = vector.load %arg2[%c0_3, %c0_4] : memref<32x128xf32, #tpu.memory_space<vmem>>, vector<32x128xf32>
    %cst_5 = arith.constant dense<0.000000e+00> : vector<1x128xf32>
    %5 = tpu.matmul %3, %4, %cst_5 {dimension_numbers = #tpu.dot_dimension_numbers<[1], [0], [0], [1], [0, 0, 1, 1], [], []>} : vector<1x32xf32>, vector<32x128xf32>, vector<1x128xf32> -> vector<1x128xf32>
    %c0_6 = arith.constant 0 : index
    %c0_7 = arith.constant 0 : index
    %6 = vector.load %arg3[%c0_6, %c0_7] : memref<1x128xf32, #tpu.memory_space<vmem>>, vector<1x128xf32>
    %7 = arith.addf %5, %6 : vector<1x128xf32>
    %cst_8 = arith.constant 0.000000e+00 : f32
    %8 = vector.broadcast %cst_8 : f32 to vector<1x128xf32>
    %9 = arith.maximumf %7, %8 : vector<1x128xf32>
    %c0_9 = arith.constant 0 : index
    %c0_10 = arith.constant 0 : index
    %10 = vector.load %arg4[%c0_9, %c0_10] : memref<128x32xf32, #tpu.memory_space<vmem>>, vector<128x32xf32>
    %cst_11 = arith.constant dense<0.000000e+00> : vector<1x32xf32>
    %11 = tpu.matmul %9, %10, %cst_11 {dimension_numbers = #tpu.dot_dimension_numbers<[1], [0], [0], [1], [0, 0, 1, 1], [], []>} : vector<1x128xf32>, vector<128x32xf32>, vector<1x32xf32> -> vector<1x32xf32>
    %c0_12 = arith.constant 0 : index
    %c0_13 = arith.constant 0 : index
    %12 = vector.load %arg5[%c0_12, %c0_13] : memref<1x32xf32, #tpu.memory_space<vmem>>, vector<1x32xf32>
    %13 = arith.addf %11, %12 : vector<1x32xf32>
    %14 = arith.negf %13 : vector<1x32xf32>
    %15 = math.exp %14 : vector<1x32xf32>
    %cst_14 = arith.constant 1.000000e+00 : f32
    %16 = vector.broadcast %cst_14 : f32 to vector<1x32xf32>
    %17 = arith.addf %16, %15 : vector<1x32xf32>
    %18 = arith.divf %16, %17 : vector<1x32xf32>
    %c0_15 = arith.constant 0 : index
    %c0_16 = arith.constant 0 : index
    %c0_17 = arith.constant 0 : index
    %19 = vector.load %arg1[%c0_15, %c0_16, %c0_17] : memref<1x32x256xf32, #tpu.memory_space<vmem>>, vector<1x32x256xf32>
    %20 = vector.shape_cast %18 : vector<1x32xf32> to vector<1x32x1xf32>
    %21 = vector.broadcast %20 : vector<1x32x1xf32> to vector<1x32x256xf32>
    %22 = arith.mulf %19, %21 : vector<1x32x256xf32>
    %c0_18 = arith.constant 0 : index
    %c0_19 = arith.constant 0 : index
    %c0_20 = arith.constant 0 : index
    %23 = vector.load %arg6[%c0_18, %c0_19, %c0_20] : memref<1x32x256xf32, #tpu.memory_space<vmem>>, vector<1x32x256xf32>
    tpu.vector_store %arg6[%c0_18, %c0_19, %c0_20], %22 {strides = array<i32>} : memref<1x32x256xf32, #tpu.memory_space<vmem>>, vector<1x32x256xf32>,
    return
  }
  func.func @transform_0(%arg0: i32) -> (i32, i32, i32) {
    %c0_i32 = arith.constant 0 : i32
    %c0_i32_0 = arith.constant 0 : i32
    %c0_i32_1 = arith.constant 0 : i32
    return %arg0, %c0_i32, %c0_i32_0 : i32, i32, i32
  }
  func.func @transform_1(%arg0: i32) -> (i32, i32) {
    %c0_i32 = arith.constant 0 : i32
    %c0_i32_0 = arith.constant 0 : i32
    %c0_i32_1 = arith.constant 0 : i32
    return %c0_i32, %c0_i32_0 : i32, i32
  }
  func.func @transform_2(%arg0: i32) -> (i32, i32) {
    %c0_i32 = arith.constant 0 : i32
    %c0_i32_0 = arith.constant 0 : i32
    %c0_i32_1 = arith.constant 0 : i32
    return %c0_i32, %c0_i32_0 : i32, i32
  }
  func.func @transform_3(%arg0: i32) -> (i32, i32) {
    %c0_i32 = arith.constant 0 : i32
    %c0_i32_0 = arith.constant 0 : i32
    %c0_i32_1 = arith.constant 0 : i32
    return %c0_i32, %c0_i32_0 : i32, i32
  }
  func.func @transform_4(%arg0: i32) -> (i32, i32) {
    %c0_i32 = arith.constant 0 : i32
    %c0_i32_0 = arith.constant 0 : i32
    %c0_i32_1 = arith.constant 0 : i32
    return %c0_i32, %c0_i32_0 : i32, i32
  }
  func.func @transform_5(%arg0: i32) -> (i32, i32, i32) {
    %c0_i32 = arith.constant 0 : i32
    %c0_i32_0 = arith.constant 0 : i32
    %c0_i32_1 = arith.constant 0 : i32
    return %arg0, %c0_i32, %c0_i32_0 : i32, i32, i32
  }
}

</mosaic_0001>

<llo_original>
// kernel: se_block.1
$region0: #{se_block.1}
  #allocation0 [shape = 'u32[]', space=smem, size = 0x4, offset = 0x4, fixed_abs, tag = 'smem constant byte address 0x4 - core index']
  #allocation1 [shape = 'u32[144,128]{1,0:T(1,128)}', space=vmem, size = 0x12000, scoped, tag = 'internal scratch']
  %s0 = inlined_call_operand.vmem [shape: f32[2,32,256], index: 0, kind: input, shape index: {}]
  %s1 = inlined_call_operand.vmem [shape: f32[32,128], index: 1, kind: input, shape index: {}]
  %s2 = inlined_call_operand.vmem [shape: f32[1,128], index: 2, kind: input, shape index: {}]
  %s3 = inlined_call_operand.vmem [shape: f32[128,32], index: 3, kind: input, shape index: {}]
  %s4 = inlined_call_operand.vmem [shape: f32[1,32], index: 4, kind: input, shape index: {}]
  %s5 = inlined_call_operand.vmem [shape: f32[2,32,256], index: 5, kind: output, shape index: {}]
  %s6 = sld [smem:[#allocation0]]
  $region53: #{se_block.1} parent=0
    _
  %s8 = ssub.s32 1, %s6
  %s9 = scalar_select 0, %s8, %s6
  loop: start=0, step=1, limit=4
  $region2: #{se_block.1} parent=0 // loop_pre_header
    _
  $region3: #{se_block.1} parent=0 // loop_header
    %s11 = sphi 0, %s15
    %p12 = scmp.ge.s32.totalorder %s11, 4
    %s21 = sphi 0, %s23
    %s24 = sphi 0, %s21
    %s25 = sphi 0, %s24
    %s41 = sphi 0, %s25
    %s45 = sphi 0, %s45
    %s47 = sphi 0, %s45
    %s48 = sphi 0, %s47
    %s62 = sphi 0, %s48
    %s66 = sphi 0, %s66
    %s68 = sphi 0, %s66
    %s69 = sphi 0, %s68
    %s83 = sphi 0, %s69
    %s87 = sphi 0, %s87
    %s89 = sphi 0, %s87
    %s90 = sphi 0, %s89
    %s104 = sphi 0, %s90
    %s108 = sphi 0, %s108
    %s110 = sphi 0, %s108
    %s111 = sphi 0, %s110
    %s125 = sphi 0, %s111
    %s131 = sphi 0, %s133
    %s134 = sphi 0, %s131
    %s135 = sphi 0, %s134
    %s151 = sphi 0, %s135
  $region4: #{se_block.1} parent=0 // loop_header_branch
    %14 = sbr.rel (%p12) target = $region8
  $region5: #{se_block.1} parent=0 // loop_body
    %s16 = ssub.s32 %s11, 1
    %s17 = ssub.s32 %s11, 2
    %s18 = sadd.s32 %s11, 1
    %s19 = ssub.s32 %s11, %s18
    %p20 = scmp.eq.s32.totalorder %s19, 0
    %s22 = sadd.s32 %s21, 1
    %s23 = scalar_select %p20, %s21, %s22
    %p26 = pneg %p20
    %p27 = scmp.eq.s32.totalorder %s11, 1
    %p28 = por %p26, %p27
    %p29 = scmp.ne.s32.totalorder %s21, %s24
    %p30 = scmp.eq.s32.totalorder %s11, 0
    %p31 = por %p29, %p30
    %p32 = scmp.ne.s32.totalorder %s21, %s24
    %p33 = scmp.eq.s32.totalorder %s16, 1
    %p34 = por %p32, %p33
    %p35 = scmp.ne.s32.totalorder %s24, %s25
    %p36 = scmp.eq.s32.totalorder %s16, 0
    %p37 = por %p35, %p36
    %p38 = scmp.ne.s32.totalorder %s24, %s25
    %p39 = scmp.eq.s32.totalorder %s17, 1
    %p40 = por %p38, %p39
    %p42 = scmp.ne.s32.totalorder %s25, %s41
    %p43 = scmp.eq.s32.totalorder %s17, 0
    %p44 = por %p42, %p43
    %s46 = sadd.s32 %s45, 1
    %p49 = scmp.eq.s32.totalorder %s11, 1
    %p50 = scmp.ne.s32.totalorder %s45, %s47
    %p51 = scmp.eq.s32.totalorder %s11, 0
    %p52 = por %p50, %p51
    %p53 = scmp.ne.s32.totalorder %s45, %s47
    %p54 = scmp.eq.s32.totalorder %s16, 1
    %p55 = por %p53, %p54
    %p56 = scmp.ne.s32.totalorder %s47, %s48
    %p57 = scmp.eq.s32.totalorder %s16, 0
    %p58 = por %p56, %p57
    %p59 = scmp.ne.s32.totalorder %s47, %s48
    %p60 = scmp.eq.s32.totalorder %s17, 1
    %p61 = por %p59, %p60
    %p63 = scmp.ne.s32.totalorder %s48, %s62
    %p64 = scmp.eq.s32.totalorder %s17, 0
    %p65 = por %p63, %p64
    %s67 = sadd.s32 %s66, 1
    %p70 = scmp.eq.s32.totalorder %s11, 1
    %p71 = scmp.ne.s32.totalorder %s66, %s68
    %p72 = scmp.eq.s32.totalorder %s11, 0
    %p73 = por %p71, %p72
    %p74 = scmp.ne.s32.totalorder %s66, %s68
    %p75 = scmp.eq.s32.totalorder %s16, 1
    %p76 = por %p74, %p75
    %p77 = scmp.ne.s32.totalorder %s68, %s69
    %p78 = scmp.eq.s32.totalorder %s16, 0
    %p79 = por %p77, %p78
    %p80 = scmp.ne.s32.totalorder %s68, %s69
    %p81 = scmp.eq.s32.totalorder %s17, 1
    %p82 = por %p80, %p81
    %p84 = scmp.ne.s32.totalorder %s69, %s83
    %p85 = scmp.eq.s32.totalorder %s17, 0
    %p86 = por %p84, %p85
    %s88 = sadd.s32 %s87, 1
    %p91 = scmp.eq.s32.totalorder %s11, 1
    %p92 = scmp.ne.s32.totalorder %s87, %s89
    %p93 = scmp.eq.s32.totalorder %s11, 0
    %p94 = por %p92, %p93
    %p95 = scmp.ne.s32.totalorder %s87, %s89
    %p96 = scmp.eq.s32.totalorder %s16, 1
    %p97 = por %p95, %p96
    %p98 = scmp.ne.s32.totalorder %s89, %s90
    %p99 = scmp.eq.s32.totalorder %s16, 0
    %p100 = por %p98, %p99
    %p101 = scmp.ne.s32.totalorder %s89, %s90
    %p102 = scmp.eq.s32.totalorder %s17, 1
    %p103 = por %p101, %p102
    %p105 = scmp.ne.s32.totalorder %s90, %s104
    %p106 = scmp.eq.s32.totalorder %s17, 0
    %p107 = por %p105, %p106
    %s109 = sadd.s32 %s108, 1
    %p112 = scmp.eq.s32.totalorder %s11, 1
    %p113 = scmp.ne.s32.totalorder %s108, %s110
    %p114 = scmp.eq.s32.totalorder %s11, 0
    %p115 = por %p113, %p114
    %p116 = scmp.ne.s32.totalorder %s108, %s110
    %p117 = scmp.eq.s32.totalorder %s16, 1
    %p118 = por %p116, %p117
    %p119 = scmp.ne.s32.totalorder %s110, %s111
    %p120 = scmp.eq.s32.totalorder %s16, 0
    %p121 = por %p119, %p120
    %p122 = scmp.ne.s32.totalorder %s110, %s111
    %p123 = scmp.eq.s32.totalorder %s17, 1
    %p124 = por %p122, %p123
    %p126 = scmp.ne.s32.totalorder %s111, %s125
    %p127 = scmp.eq.s32.totalorder %s17, 0
    %p128 = por %p126, %p127
    %s129 = ssub.s32 %s11, %s18
    %p130 = scmp.eq.s32.totalorder %s129, 0
    %s132 = sadd.s32 %s131, 1
    %s133 = scalar_select %p130, %s131, %s132
    %p136 = pneg %p130
    %p137 = scmp.eq.s32.totalorder %s11, 1
    %p138 = por %p136, %p137
    %p139 = scmp.ne.s32.totalorder %s131, %s134
    %p140 = scmp.eq.s32.totalorder %s11, 0
    %p141 = por %p139, %p140
    %p142 = scmp.ne.s32.totalorder %s131, %s134
    %p143 = scmp.eq.s32.totalorder %s16, 1
    %p144 = por %p142, %p143
    %p145 = scmp.ne.s32.totalorder %s134, %s135
    %p146 = scmp.eq.s32.totalorder %s16, 0
    %p147 = por %p145, %p146
    %p148 = scmp.ne.s32.totalorder %s134, %s135
    %p149 = scmp.eq.s32.totalorder %s17, 1
    %p150 = por %p148, %p149
    %p152 = scmp.ne.s32.totalorder %s135, %s151
    %p153 = scmp.eq.s32.totalorder %s17, 0
    %p154 = por %p152, %p153
    %p155 = scmp.le.s32.totalorder 1, %s11
    %p156 = scmp.lt.s32.totalorder %s11, 3
    %p157 = pnand %p155, %p156
    %p158 = pneg %p157
    // Predicated region
    $region9: #{se_block.1} parent=5 // pred_check
      _
    $region10: #{se_block.1} parent=5 // pred_check_branch
      %160 = sbr.rel (%p157) target = $region12
    $region11: #{se_block.1} parent=5 // pred_region
      %s161 = ssub.s32 %s11, 1
      // Predicated region
      $region13: #{se_block.1} parent=11 // pred_check
        %p162 = pneg %p58
      $region14: #{se_block.1} parent=11 // pred_check_branch
        %164 = sbr.rel (%p162) target = $region16
      $region15: #{se_block.1} parent=11 // pred_region
        _
      $region16: #{se_block.1} parent=11 // pred_fallthru
        _
      // Predicated region
      $region17: #{se_block.1} parent=11 // pred_check
        %p165 = pneg %p79
      $region18: #{se_block.1} parent=11 // pred_check_branch
        %167 = sbr.rel (%p165) target = $region20
      $region19: #{se_block.1} parent=11 // pred_region
        _
      $region20: #{se_block.1} parent=11 // pred_fallthru
        _
      // Predicated region
      $region21: #{se_block.1} parent=11 // pred_check
        %p168 = pneg %p100
      $region22: #{se_block.1} parent=11 // pred_check_branch
        %170 = sbr.rel (%p168) target = $region24
      $region23: #{se_block.1} parent=11 // pred_region
        _
      $region24: #{se_block.1} parent=11 // pred_fallthru
        _
      // Predicated region
      $region25: #{se_block.1} parent=11 // pred_check
        %p171 = pneg %p121
      $region26: #{se_block.1} parent=11 // pred_check_branch
        %173 = sbr.rel (%p171) target = $region28
      $region27: #{se_block.1} parent=11 // pred_region
        _
      $region28: #{se_block.1} parent=11 // pred_fallthru
        _
    $region12: #{se_block.1} parent=5 // pred_fallthru
      _
    %p174 = scmp.lt.s32.totalorder %s11, 2
    // Predicated region
    $region29: #{se_block.1} parent=5 // pred_check
      %p175 = pneg %p174
    $region30: #{se_block.1} parent=5 // pred_check_branch
      %177 = sbr.rel (%p175) target = $region32
    $region31: #{se_block.1} parent=5 // pred_region
      // Predicated region
      $region33: #{se_block.1} parent=31 // pred_check
        %p178 = pneg %p31
      $region34: #{se_block.1} parent=31 // pred_check_branch
        %180 = sbr.rel (%p178) target = $region36
      $region35: #{se_block.1} parent=31 // pred_region
        %p181 = scmp.lt.s32.totalorder %s11, 1
        %s182 = scalar_select %p181, %s11, 1
        %s183 = smul.addr %s182, 8
        %s184 = smul.addr %s183, 8
        %s185 = scalar_lea.vmem %s0, %s184
      $region36: #{se_block.1} parent=31 // pred_fallthru
        _
    $region32: #{se_block.1} parent=5 // pred_fallthru
      _
    %p186 = scmp.le.s32.totalorder 1, %s11
    %p187 = scmp.lt.s32.totalorder %s11, 3
    %p188 = pnand %p186, %p187
    %p189 = pneg %p188
    // Predicated region
    $region37: #{se_block.1} parent=5 // pred_check
      _
    $region38: #{se_block.1} parent=5 // pred_check_branch
      %191 = sbr.rel (%p188) target = $region40
    $region39: #{se_block.1} parent=5 // pred_region
      %s192 = ssub.s32 %s11, 1
      %p193 = scmp.lt.s32.totalorder %s16, 1
      %s194 = scalar_select %p193, %s16, 1
      %s195 = smul.addr %s194, 8
      %s196 = smul.addr %s195, 8
      %s197 = scalar_lea.vmem %s0, %s196
      %p198 = pneg %p37
      %p199 = pneg %p34
      %p200 = pneg %p58
      %p201 = pneg %p55
      %p202 = pneg %p79
      %p203 = pneg %p76
      %p204 = pneg %p100
      %p205 = pneg %p97
      %p206 = pneg %p121
      %p207 = pneg %p118
      %p208 = pneg %p147
      %p209 = pneg %p144
      %p210 = scmp.lt.s32.totalorder %s16, 1
      %s211 = scalar_select %p210, %s16, 1
      %s212 = smul.addr %s211, 8
      %s213 = smul.addr %s212, 8
      %s214 = scalar_lea.vmem %s5, %s213
      %p215 = scmp.lt.s32.totalorder %s16, 1
      %s216 = scalar_select %p215, %s16, 1
      %s217 = smul.addr %s216, 8
      %s218 = smul.addr %s217, 8
      %s219 = scalar_lea.vmem %s0, %s218
      %p220 = scmp.lt.s32.totalorder %s16, 1
      %s221 = scalar_select %p220, %s16, 1
      %s222 = smul.addr %s221, 8
      %s223 = smul.addr %s222, 8
      %s224 = scalar_lea.vmem %s5, %s223
      %v225 = vld [vmem:[%s219] sm:$0xff]
      %v226 = vld [vmem:[%s219 + $0x8] sm:$0xff]
      %v227 = vld [vmem:[%s219 + $0x10] sm:$0xff]
      %v228 = vld [vmem:[%s219 + $0x18] sm:$0xff]
      %v229 = vld [vmem:[%s219 + $0x20] sm:$0xff]
      %v230 = vld [vmem:[%s219 + $0x28] sm:$0xff]
      %v231 = vld [vmem:[%s219 + $0x30] sm:$0xff]
      %v232 = vld [vmem:[%s219 + $0x38] sm:$0xff]
      %v233 = vadd.f32 %v225, %v226
      %234 = vadd.xlane.f32.xlu0 %v233
      %v235 = vpop.xlane.xlu0 %234
      %v236 = vadd.f32 %v227, %v228
      %237 = vadd.xlane.f32.xlu0 %v236
      %v238 = vpop.xlane.xlu0 %237
      %v239 = vadd.f32 %v229, %v230
      %240 = vadd.xlane.f32.xlu0 %v239
      %v241 = vpop.xlane.xlu0 %240
      %v242 = vadd.f32 %v231, %v232
      %243 = vadd.xlane.f32.xlu0 %v242
      %v244 = vpop.xlane.xlu0 %243
      %v245 = vmul.f32 %v235, 0.00390625
      %v246 = vmul.f32 %v238, 0.00390625
      %v247 = vmul.f32 %v241, 0.00390625
      %v248 = vmul.f32 %v244, 0.00390625
      %v249 = vld [vmem:[%s1] sm:$0xff]
      %v250 = vld [vmem:[%s1 + $0x8] sm:$0xff]
      %v251 = vld [vmem:[%s1 + $0x10] sm:$0xff]
      %v252 = vld [vmem:[%s1 + $0x18] sm:$0xff]
      %v253 = vld [vmem:[%s2] sm:$0x1]
      %v258 = vlaneseq
      %v259 = vand.u32 %v258, 127
      %v260 = vlaneseq
      %v261 = vshrl.u32 %v260, 7
      %v262 = vsub.s32 %v259, %v261
      %v263 = vrot.slane %v245, %v262
      %v264 = vadd.s32 %v259, 4294967288
      %v265 = vlaneseq
      %v266 = vshrl.u32 %v265, 7
      %v267 = vsub.s32 %v264, %v266
      %v268 = vrot.slane %v246, %v267
      %vm269 = vcmask 130112
      %v270 = vsel %vm269, %v268, %v263
      %v271 = vadd.s32 %v259, 4294967280
      %v272 = vlaneseq
      %v273 = vshrl.u32 %v272, 7
      %v274 = vsub.s32 %v271, %v273
      %v275 = vrot.slane %v247, %v274
      %vm276 = vcmask 195712
      %v277 = vsel %vm276, %v275, %v270
      %v278 = vadd.s32 %v259, 4294967272
      %v279 = vlaneseq
      %v280 = vshrl.u32 %v279, 7
      %v281 = vsub.s32 %v278, %v280
      %v282 = vrot.slane %v248, %v281
      %vm283 = vcmask 261312
      %v284 = vsel %vm283, %v282, %v277
      %vm285 = vcmask 261120
      %v286 = vsel %vm285, %v284, 0
      %288 = vmatprep.subr.mxu0 0.0
      %289 = vmatpush1.msra.mxu0 0.0
      %290 = vmatprep.subr.mxu0 0.0
      %291 = vmatpush1.msra.mxu0 0.0
      %292 = vmatprep.subr.mxu0 0.0
      %293 = vmatpush1.msra.mxu0 0.0
      %294 = vmatprep.subr.mxu0 0.0
      %295 = vmatpush1.msra.mxu0 0.0
      %296 = vmatprep.subr.mxu0 0.0
      %297 = vmatpush1.msra.mxu0 0.0
      %298 = vmatprep.subr.mxu0 0.0
      %299 = vmatpush1.msra.mxu0 0.0
      %300 = vmatprep.subr.mxu0 0.0
      %301 = vmatpush1.msra.mxu0 0.0
      %302 = vmatprep.subr.mxu0 0.0
      %303 = vmatpush1.msra.mxu0 0.0
      %304 = vmatprep.subr.mxu0 0.0
      %305 = vmatpush1.msra.mxu0 0.0
      %306 = vmatprep.subr.mxu0 0.0
      %307 = vmatpush1.msra.mxu0 0.0
      %308 = vmatprep.subr.mxu0 0.0
      %309 = vmatpush1.msra.mxu0 0.0
      %310 = vmatprep.subr.mxu0 0.0
      %311 = vmatpush1.msra.mxu0 0.0
      %312 = vmatprep.subr.mxu0 0.0
      %313 = vmatpush1.msra.mxu0 %v252
      %314 = vmatprep.subr.mxu0 0.0
      %315 = vmatpush1.msra.mxu0 %v251
      %316 = vmatprep.subr.mxu0 0.0
      %317 = vmatpush1.msra.mxu0 %v250
      %318 = vmatprep.subr.mxu0 0.0
      %319 = vmatpush1.msra.mxu0 %v249
      %320 = vmatprep.subr.mxu0 0.0
      %321 = vmatpush2.msra.mxu0 0.0
      %322 = vmatprep.subr.mxu0 0.0
      %323 = vmatpush2.msra.mxu0 0.0
      %324 = vmatprep.subr.mxu0 0.0
      %325 = vmatpush2.msra.mxu0 0.0
      %326 = vmatprep.subr.mxu0 0.0
      %327 = vmatpush2.msra.mxu0 0.0
      %328 = vmatprep.subr.mxu0 0.0
      %329 = vmatpush2.msra.mxu0 0.0
      %330 = vmatprep.subr.mxu0 0.0
      %331 = vmatpush2.msra.mxu0 0.0
      %332 = vmatprep.subr.mxu0 0.0
      %333 = vmatpush2.msra.mxu0 0.0
      %334 = vmatprep.subr.mxu0 0.0
      %335 = vmatpush2.msra.mxu0 0.0
      %336 = vmatprep.subr.mxu0 0.0
      %337 = vmatpush2.msra.mxu0 0.0
      %338 = vmatprep.subr.mxu0 0.0
      %339 = vmatpush2.msra.mxu0 0.0
      %340 = vmatprep.subr.mxu0 0.0
      %341 = vmatpush2.msra.mxu0 0.0
      %342 = vmatprep.subr.mxu0 0.0
      %343 = vmatpush2.msra.mxu0 0.0
      %344 = vmatprep.subr.mxu0 0.0
      %345 = vmatpush2.msra.mxu0 0.0
      %346 = vmatprep.subr.mxu0 0.0
      %347 = vmatpush2.msra.mxu0 0.0
      %348 = vmatprep.subr.mxu0 0.0
      %349 = vmatpush2.msra.mxu0 0.0
      %350 = vmatprep.subr.mxu0 0.0
      %351 = vmatpush2.msra.mxu0 0.0
      %352 = vmatprep.mubr.f32.mxu0 0.0
      %353 = vmatmul.mubr.f32.gmra.mxu0 %v286
      %v354 = vpop.f32.mrf.mxu0
      %v355 = vadd.f32 %v253, %v354
      %v356 = vpop.f32.mrf.mxu0
      %357 = vdwg.mxu0
      %v358 = vmax.f32 %v355, 0.0
      %v359 = vld [vmem:[%s3] sm:$0xff]
      %v360 = vld [vmem:[%s3 + $0x8] sm:$0xff]
      %v361 = vld [vmem:[%s3 + $0x10] sm:$0xff]
      %v362 = vld [vmem:[%s3 + $0x18] sm:$0xff]
      %v363 = vld [vmem:[%s3 + $0x20] sm:$0xff]
      %v364 = vld [vmem:[%s3 + $0x28] sm:$0xff]
      %v365 = vld [vmem:[%s3 + $0x30] sm:$0xff]
      %v366 = vld [vmem:[%s3 + $0x38] sm:$0xff]
      %v367 = vld [vmem:[%s3 + $0x40] sm:$0xff]
      %v368 = vld [vmem:[%s3 + $0x48] sm:$0xff]
      %v369 = vld [vmem:[%s3 + $0x50] sm:$0xff]
      %v370 = vld [vmem:[%s3 + $0x58] sm:$0xff]
      %v371 = vld [vmem:[%s3 + $0x60] sm:$0xff]
      %v372 = vld [vmem:[%s3 + $0x68] sm:$0xff]
      %v373 = vld [vmem:[%s3 + $0x70] sm:$0xff]
      %v374 = vld [vmem:[%s3 + $0x78] sm:$0xff]
      %v375 = vld [vmem:[%s4] sm:$0x1]
      %376 = vmatprep.subr.mxu0 0.0
      %377 = vmatpush1.msra.mxu0 %v374
      %378 = vmatprep.subr.mxu0 0.0
      %379 = vmatpush1.msra.mxu0 %v373
      %380 = vmatprep.subr.mxu0 0.0
      %381 = vmatpush1.msra.mxu0 %v372
      %382 = vmatprep.subr.mxu0 0.0
      %383 = vmatpush1.msra.mxu0 %v371
      %384 = vmatprep.subr.mxu0 0.0
      %385 = vmatpush1.msra.mxu0 %v370
      %386 = vmatprep.subr.mxu0 0.0
      %387 = vmatpush1.msra.mxu0 %v369
      %388 = vmatprep.subr.mxu0 0.0
      %389 = vmatpush1.msra.mxu0 %v368
      %390 = vmatprep.subr.mxu0 0.0
      %391 = vmatpush1.msra.mxu0 %v367
      %392 = vmatprep.subr.mxu0 0.0
      %393 = vmatpush1.msra.mxu0 %v366
      %394 = vmatprep.subr.mxu0 0.0
      %395 = vmatpush1.msra.mxu0 %v365
      %396 = vmatprep.subr.mxu0 0.0
      %397 = vmatpush1.msra.mxu0 %v364
      %398 = vmatprep.subr.mxu0 0.0
      %399 = vmatpush1.msra.mxu0 %v363
      %400 = vmatprep.subr.mxu0 0.0
      %401 = vmatpush1.msra.mxu0 %v362
      %402 = vmatprep.subr.mxu0 0.0
      %403 = vmatpush1.msra.mxu0 %v361
      %404 = vmatprep.subr.mxu0 0.0
      %405 = vmatpush1.msra.mxu0 %v360
      %406 = vmatprep.subr.mxu0 0.0
      %407 = vmatpush1.msra.mxu0 %v359
      %408 = vmatprep.subr.mxu0 0.0
      %409 = vmatpush2.msra.mxu0 0.0
      %410 = vmatprep.subr.mxu0 0.0
      %411 = vmatpush2.msra.mxu0 0.0
      %412 = vmatprep.subr.mxu0 0.0
      %413 = vmatpush2.msra.mxu0 0.0
      %414 = vmatprep.subr.mxu0 0.0
      %415 = vmatpush2.msra.mxu0 0.0
      %416 = vmatprep.subr.mxu0 0.0
      %417 = vmatpush2.msra.mxu0 0.0
      %418 = vmatprep.subr.mxu0 0.0
      %419 = vmatpush2.msra.mxu0 0.0
      %420 = vmatprep.subr.mxu0 0.0
      %421 = vmatpush2.msra.mxu0 0.0
      %422 = vmatprep.subr.mxu0 0.0
      %423 = vmatpush2.msra.mxu0 0.0
      %424 = vmatprep.subr.mxu0 0.0
      %425 = vmatpush2.msra.mxu0 0.0
      %426 = vmatprep.subr.mxu0 0.0
      %427 = vmatpush2.msra.mxu0 0.0
      %428 = vmatprep.subr.mxu0 0.0
      %429 = vmatpush2.msra.mxu0 0.0
      %430 = vmatprep.subr.mxu0 0.0
      %431 = vmatpush2.msra.mxu0 0.0
      %432 = vmatprep.subr.mxu0 0.0
      %433 = vmatpush2.msra.mxu0 0.0
      %434 = vmatprep.subr.mxu0 0.0
      %435 = vmatpush2.msra.mxu0 0.0
      %436 = vmatprep.subr.mxu0 0.0
      %437 = vmatpush2.msra.mxu0 0.0
      %438 = vmatprep.subr.mxu0 0.0
      %439 = vmatpush2.msra.mxu0 0.0
      %440 = vmatprep.mubr.f32.mxu0 0.0
      %441 = vmatmul.mubr.f32.gmra.mxu0 %v358
      %v442 = vpop.f32.mrf.mxu0
      %v443 = vadd.f32 %v375, %v442
      %v444 = vpop.f32.mrf.mxu0
      %445 = vdwg.mxu0
      %v446 = vxor.u32 %v443, 2147483648
      %v447 = vmul.f32 %v446, 1.442695
      %v448 = vpow.pop %v447
      %v449 = vadd.f32 %v448, 1.0
      %v450 = vrcp.pop %v449
      %v451 = vmul.f32 1.0, %v450
      %v452 = vlaneseq
      %v453 = vshrl.u32 %v452, 7
      %v454 = vsub.s32 0, %v453
      %v455 = vrot.slane %v451, %v454
      %457 = vbcast.lane.b32.xlu0 %v455, 256
      %v458 = vpop.permute.xlu0 %457
      %s460 = sor.u32 256, 8
      %461 = vbcast.lane.b32.xlu0 %v455, %s460
      %v462 = vpop.permute.xlu0 %461
      %s464 = sor.u32 256, 16
      %465 = vbcast.lane.b32.xlu0 %v455, %s464
      %v466 = vpop.permute.xlu0 %465
      %s468 = sor.u32 256, 24
      %469 = vbcast.lane.b32.xlu0 %v455, %s468
      %v470 = vpop.permute.xlu0 %469
      %v471 = vmul.f32 %v225, %v458
      %v472 = vmul.f32 %v226, %v458
      %v473 = vmul.f32 %v227, %v462
      %v474 = vmul.f32 %v228, %v462
      %v475 = vmul.f32 %v229, %v466
      %v476 = vmul.f32 %v230, %v466
      %v477 = vmul.f32 %v231, %v470
      %v478 = vmul.f32 %v232, %v470
      %479 = vst [vmem:[%s224] sm:$0xff] %v471
      %480 = vst [vmem:[%s224 + $0x8] sm:$0xff] %v472
      %481 = vst [vmem:[%s224 + $0x10] sm:$0xff] %v473
      %482 = vst [vmem:[%s224 + $0x18] sm:$0xff] %v474
      %483 = vst [vmem:[%s224 + $0x20] sm:$0xff] %v475
      %484 = vst [vmem:[%s224 + $0x28] sm:$0xff] %v476
      %485 = vst [vmem:[%s224 + $0x30] sm:$0xff] %v477
      %486 = vst [vmem:[%s224 + $0x38] sm:$0xff] %v478
      %p487 = scmp.lt.s32.totalorder %s16, 1
      %s488 = scalar_select %p487, %s16, 1
      %s489 = smul.addr %s488, 8
      %s490 = smul.addr %s489, 8
      %s491 = scalar_lea.vmem %s5, %s490
      // Predicated region
      $region41: #{se_block.1} parent=39 // pred_check
        %p492 = pneg %p144
      $region42: #{se_block.1} parent=39 // pred_check_branch
        %494 = sbr.rel (%p492) target = $region44
      $region43: #{se_block.1} parent=39 // pred_region
        _
      $region44: #{se_block.1} parent=39 // pred_fallthru
        _
    $region40: #{se_block.1} parent=5 // pred_fallthru
      _
    %p495 = scmp.le.s32.totalorder 2, %s11
    // Predicated region
    $region45: #{se_block.1} parent=5 // pred_check
      %p496 = pneg %p495
    $region46: #{se_block.1} parent=5 // pred_check_branch
      %498 = sbr.rel (%p496) target = $region48
    $region47: #{se_block.1} parent=5 // pred_region
      %s499 = ssub.s32 %s11, 2
      // Predicated region
      $region49: #{se_block.1} parent=47 // pred_check
        %p500 = pneg %p150
      $region50: #{se_block.1} parent=47 // pred_check_branch
        %502 = sbr.rel (%p500) target = $region52
      $region51: #{se_block.1} parent=47 // pred_region
        %p503 = scmp.lt.s32.totalorder %s17, 1
        %s504 = scalar_select %p503, %s17, 1
        %s505 = smul.addr %s504, 8
        %s506 = smul.addr %s505, 8
        %s507 = scalar_lea.vmem %s5, %s506
      $region52: #{se_block.1} parent=47 // pred_fallthru
        _
    $region48: #{se_block.1} parent=5 // pred_fallthru
      _
  $region6: #{se_block.1} parent=0 // loop_footer
    %s15 = sadd.s32 1, %s11
  $region7: #{se_block.1} parent=0 // loop_footer_branch
    %10 = sbr.rel target = $region3
  $region8: #{se_block.1} parent=0 // loop_exit
    _

</llo_original>
